<compile_context>
chip_gen: v6e
topology: v6e:2x2x1
jax: 0.10.0
libtpu: 0.0.40
codegen_flags: <defaults>
</compile_context>

<pallas_src>
import functools

import jax
import jax.numpy as jnp
from jax import lax
from jax.experimental import pallas as pl
from jax.experimental.pallas import tpu as pltpu


def gaussian_policy_kernel(
    x_ref,    # [tb, num_inputs]
    w1_ref,   # [num_inputs, hidden]
    b1_ref,   # [1, hidden]
    w2_ref,   # [hidden, hidden]
    b2_ref,   # [1, hidden]
    wh_ref,   # [hidden, 2*num_actions]   (mean | log_std heads, fused)
    bh_ref,   # [1, 2*num_actions]
    out_ref,  # [tb, 2*num_actions]       (mean | clamped log_std)
    *,
    num_actions,
):
    x = x_ref[...]

    # fc1 + ReLU
    h1 = jnp.dot(x, w1_ref[...], preferred_element_type=jnp.float32) + b1_ref[...]
    h1 = jnp.maximum(h1, 0.0)

    # fc2 + ReLU
    h2 = jnp.dot(h1, w2_ref[...], preferred_element_type=jnp.float32) + b2_ref[...]
    h2 = jnp.maximum(h2, 0.0)

    # Fused heads: one MXU pass produces [tb, 2*num_actions].
    heads = jnp.dot(h2, wh_ref[...], preferred_element_type=jnp.float32) + bh_ref[...]

    # clamp(-20, 2) applied only to the log_std half (columns >= num_actions),
    # then a single lane-dense store of the combined slab.
    col = lax.broadcasted_iota(jnp.int32, heads.shape, 1)
    clamped = jnp.clip(heads, -20.0, 2.0)
    heads = jnp.where(col >= num_actions, clamped, heads)

    out_ref[...] = heads.astype(out_ref.dtype)


def _pick_batch_tile(B):
    """Largest batch tile (multiple of 8, <=256) that evenly divides B."""
    for tb in (256, 128, 64, 32, 16, 8):
        if B % tb == 0:
            return tb
    return B  # fall back to a single full-batch block


def gaussian_policy_forward(state, params):
    """Pallas implementation of GaussianPolicy.forward(state) -> (mean, log_std)."""
    w1, b1, w2, b2, wm, bm, ws, bs = params
    B, num_inputs = state.shape
    hidden = w1.shape[1]
    num_actions = wm.shape[1]

    # Fuse the two heads: [hidden, 2A] weight, [1, 2A] bias.
    wh = jnp.concatenate([wm, ws], axis=1)
    bh = jnp.concatenate([bm, bs], axis=1)

    tb = _pick_batch_tile(B)
    grid = (B // tb,)

    kernel = functools.partial(gaussian_policy_kernel, num_actions=num_actions)

    flops = 2 * B * (num_inputs * hidden + hidden * hidden + hidden * 2 * num_actions)
    bytes_accessed = 4 * (
        state.size + w1.size + b1.size + w2.size + b2.size
        + wh.size + bh.size + B * 2 * num_actions
    )

    out = pl.pallas_call(
        kernel,
        out_shape=jax.ShapeDtypeStruct((B, 2 * num_actions), jnp.float32),
        grid_spec=pltpu.PrefetchScalarGridSpec(
            num_scalar_prefetch=0,
            grid=grid,
            in_specs=[
                # Batch tile of the state; moves with the grid.
                pl.BlockSpec((tb, num_inputs), lambda i: (i, 0)),
                # Weights/biases: constant block index -> resident in VMEM.
                pl.BlockSpec(w1.shape, lambda i: (0, 0)),
                pl.BlockSpec(b1.shape, lambda i: (0, 0)),
                pl.BlockSpec(w2.shape, lambda i: (0, 0)),
                pl.BlockSpec(b2.shape, lambda i: (0, 0)),
                pl.BlockSpec(wh.shape, lambda i: (0, 0)),
                pl.BlockSpec(bh.shape, lambda i: (0, 0)),
            ],
            out_specs=pl.BlockSpec((tb, 2 * num_actions), lambda i: (i, 0)),
        ),
        compiler_params=pltpu.CompilerParams(
            dimension_semantics=("parallel",),
        ),
        cost_estimate=pl.CostEstimate(
            flops=flops, transcendentals=0, bytes_accessed=bytes_accessed
        ),
    )(state, w1, b1, w2, b2, wh, bh)

    # Split the combined slab outside the kernel (free layout plumbing).
    mean = out[:, :num_actions]
    log_std = out[:, num_actions:]
    return mean, log_std


def init_params(key, num_inputs, num_actions, hidden_size):
    """Deterministic synthetic weights, stored as [in_features, out_features]."""
    ks = jax.random.split(key, 8)

    def lin(kw, kb, fan_in, fan_out):
        bound = 1.0 / jnp.sqrt(fan_in)
        w = jax.random.uniform(kw, (fan_in, fan_out), jnp.float32, -bound, bound)
        b = jax.random.uniform(kb, (1, fan_out), jnp.float32, -bound, bound)
        return w, b

    w1, b1 = lin(ks[0], ks[1], num_inputs, hidden_size)
    w2, b2 = lin(ks[2], ks[3], hidden_size, hidden_size)
    wm, bm = lin(ks[4], ks[5], hidden_size, num_actions)
    ws, bs = lin(ks[6], ks[7], hidden_size, num_actions)
    return (w1, b1, w2, b2, wm, bm, ws, bs)


def reference_forward(state, params):
    """Pure-JAX reference for correctness checking (matches PyTorch forward)."""
    w1, b1, w2, b2, wm, bm, ws, bs = params
    h1 = jnp.maximum(state @ w1 + b1, 0.0)
    h2 = jnp.maximum(h1 @ w2 + b2, 0.0)
    mean = h2 @ wm + bm
    log_std = jnp.clip(h2 @ ws + bs, -20.0, 2.0)
    return mean, log_std


if __name__ == "__main__":
    # Small but tile-aligned shapes: batch fills a (8,128)-tile's sublanes,
    # hidden matches the module default (256).
    B, num_inputs, hidden_size, num_actions = 128, 16, 256, 8

    key = jax.random.PRNGKey(0)
    k_params, k_state = jax.random.split(key)

    params = init_params(k_params, num_inputs, num_actions, hidden_size)
    state = jax.random.normal(k_state, (B, num_inputs), jnp.float32)

    mean, log_std = gaussian_policy_forward(state, params)
    jax.block_until_ready((mean, log_std))

    # Sanity check against pure-JAX reference.
    ref_mean, ref_log_std = reference_forward(state, params)
    assert mean.shape == (B, num_actions)
    assert log_std.shape == (B, num_actions)
    assert jnp.allclose(mean, ref_mean, atol=1e-5, rtol=1e-5)
    assert jnp.allclose(log_std, ref_log_std, atol=1e-5, rtol=1e-5)

    # TODO(synk): sample() (rsample + tanh squash + log_prob) is outside
    # forward(); it would need in-kernel PRNG via pltpu.prng_seed /
    # pltpu.stateful_normal if a fused sampler were required.

    print("KERNEL_OK")
</pallas_src>

<mosaic_0001>
module attributes {stable_mosaic.version = 11 : i64} {
  func.func @gaussian_policy_kernel(%arg0: i32, %arg1: memref<128x16xf32, #tpu.memory_space<vmem>>, %arg2: memref<16x256xf32, #tpu.memory_space<vmem>>, %arg3: memref<1x256xf32, #tpu.memory_space<vmem>>, %arg4: memref<256x256xf32, #tpu.memory_space<vmem>>, %arg5: memref<1x256xf32, #tpu.memory_space<vmem>>, %arg6: memref<256x16xf32, #tpu.memory_space<vmem>>, %arg7: memref<1x16xf32, #tpu.memory_space<vmem>>, %arg8: memref<128x16xf32, #tpu.memory_space<vmem>>) attributes {dimension_semantics = [#tpu.dimension_semantics<parallel>], iteration_bounds = array<i64: 1>, scalar_prefetch = 0 : i64, scratch_operands = 0 : i64, tpu.core_type = #tpu.core_type<tc>, window_params = [{transform_indices = @transform_0, window_bounds = array<i64: 128, 16>}, {pipeline_mode = #tpu.pipeline_mode<synchronous>, transform_indices = @transform_1, window_bounds = array<i64: 16, 256>}, {pipeline_mode = #tpu.pipeline_mode<synchronous>, transform_indices = @transform_2, window_bounds = array<i64: 1, 256>}, {pipeline_mode = #tpu.pipeline_mode<synchronous>, transform_indices = @transform_3, window_bounds = array<i64: 256, 256>}, {pipeline_mode = #tpu.pipeline_mode<synchronous>, transform_indices = @transform_4, window_bounds = array<i64: 1, 256>}, {pipeline_mode = #tpu.pipeline_mode<synchronous>, transform_indices = @transform_5, window_bounds = array<i64: 256, 16>}, {pipeline_mode = #tpu.pipeline_mode<synchronous>, transform_indices = @transform_6, window_bounds = array<i64: 1, 16>}, {transform_indices = @transform_7, window_bounds = array<i64: 128, 16>}]} {
    %c0 = arith.constant 0 : index
    %c0_0 = arith.constant 0 : index
    %0 = vector.load %arg1[%c0, %c0_0] : memref<128x16xf32, #tpu.memory_space<vmem>>, vector<128x16xf32>
    %c0_1 = arith.constant 0 : index
    %c0_2 = arith.constant 0 : index
    %1 = vector.load %arg2[%c0_1, %c0_2] : memref<16x256xf32, #tpu.memory_space<vmem>>, vector<16x256xf32>
    %cst = arith.constant dense<0.000000e+00> : vector<128x256xf32>
    %2 = tpu.matmul %0, %1, %cst {dimension_numbers = #tpu.dot_dimension_numbers<[1], [0], [0], [1], [0, 0, 1, 1], [], []>} : vector<128x16xf32>, vector<16x256xf32>, vector<128x256xf32> -> vector<128x256xf32>
    %c0_3 = arith.constant 0 : index
    %c0_4 = arith.constant 0 : index
    %3 = vector.load %arg3[%c0_3, %c0_4] : memref<1x256xf32, #tpu.memory_space<vmem>>, vector<1x256xf32>
    %4 = vector.broadcast %3 : vector<1x256xf32> to vector<128x256xf32>
    %5 = arith.addf %2, %4 : vector<128x256xf32>
    %cst_5 = arith.constant 0.000000e+00 : f32
    %6 = vector.broadcast %cst_5 : f32 to vector<128x256xf32>
    %7 = arith.maximumf %5, %6 : vector<128x256xf32>
    %c0_6 = arith.constant 0 : index
    %c0_7 = arith.constant 0 : index
    %8 = vector.load %arg4[%c0_6, %c0_7] : memref<256x256xf32, #tpu.memory_space<vmem>>, vector<256x256xf32>
    %cst_8 = arith.constant dense<0.000000e+00> : vector<128x256xf32>
    %9 = tpu.matmul %7, %8, %cst_8 {dimension_numbers = #tpu.dot_dimension_numbers<[1], [0], [0], [1], [0, 0, 1, 1], [], []>} : vector<128x256xf32>, vector<256x256xf32>, vector<128x256xf32> -> vector<128x256xf32>
    %c0_9 = arith.constant 0 : index
    %c0_10 = arith.constant 0 : index
    %10 = vector.load %arg5[%c0_9, %c0_10] : memref<1x256xf32, #tpu.memory_space<vmem>>, vector<1x256xf32>
    %11 = vector.broadcast %10 : vector<1x256xf32> to vector<128x256xf32>
    %12 = arith.addf %9, %11 : vector<128x256xf32>
    %cst_11 = arith.constant 0.000000e+00 : f32
    %13 = vector.broadcast %cst_11 : f32 to vector<128x256xf32>
    %14 = arith.maximumf %12, %13 : vector<128x256xf32>
    %c0_12 = arith.constant 0 : index
    %c0_13 = arith.constant 0 : index
    %15 = vector.load %arg6[%c0_12, %c0_13] : memref<256x16xf32, #tpu.memory_space<vmem>>, vector<256x16xf32>
    %cst_14 = arith.constant dense<0.000000e+00> : vector<128x16xf32>
    %16 = tpu.matmul %14, %15, %cst_14 {dimension_numbers = #tpu.dot_dimension_numbers<[1], [0], [0], [1], [0, 0, 1, 1], [], []>} : vector<128x256xf32>, vector<256x16xf32>, vector<128x16xf32> -> vector<128x16xf32>
    %c0_15 = arith.constant 0 : index
    %c0_16 = arith.constant 0 : index
    %17 = vector.load %arg7[%c0_15, %c0_16] : memref<1x16xf32, #tpu.memory_space<vmem>>, vector<1x16xf32>
    %18 = vector.broadcast %17 : vector<1x16xf32> to vector<128x16xf32>
    %19 = arith.addf %16, %18 : vector<128x16xf32>
    %20 = tpu.iota {dimensions = array<i32: 1>} : vector<128x16xi32>
    %cst_17 = arith.constant -2.000000e+01 : f32
    %cst_18 = arith.constant 2.000000e+00 : f32
    %21 = vector.broadcast %cst_17 : f32 to vector<128x16xf32>
    %22 = arith.maximumf %21, %19 : vector<128x16xf32>
    %23 = vector.broadcast %cst_18 : f32 to vector<128x16xf32>
    %24 = arith.minimumf %23, %22 : vector<128x16xf32>
    %c8_i32 = arith.constant 8 : i32
    %25 = vector.broadcast %c8_i32 : i32 to vector<128x16xi32>
    %26 = arith.cmpi sge, %20, %25 : vector<128x16xi32>
    %27 = arith.select %26, %24, %19 : vector<128x16xi1>, vector<128x16xf32>
    %c0_19 = arith.constant 0 : index
    %c0_20 = arith.constant 0 : index
    %28 = vector.load %arg8[%c0_19, %c0_20] : memref<128x16xf32, #tpu.memory_space<vmem>>, vector<128x16xf32>
    tpu.vector_store %arg8[%c0_19, %c0_20], %27 {strides = array<i32>} : memref<128x16xf32, #tpu.memory_space<vmem>>, vector<128x16xf32>,
    return
  }
  func.func @transform_0(%arg0: i32) -> (i32, i32) {
    %c0_i32 = arith.constant 0 : i32
    %c0_i32_0 = arith.constant 0 : i32
    return %arg0, %c0_i32 : i32, i32
  }
  func.func @transform_1(%arg0: i32) -> (i32, i32) {
    %c0_i32 = arith.constant 0 : i32
    %c0_i32_0 = arith.constant 0 : i32
    %c0_i32_1 = arith.constant 0 : i32
    return %c0_i32, %c0_i32_0 : i32, i32
  }
  func.func @transform_2(%arg0: i32) -> (i32, i32) {
    %c0_i32 = arith.constant 0 : i32
    %c0_i32_0 = arith.constant 0 : i32
    %c0_i32_1 = arith.constant 0 : i32
    return %c0_i32, %c0_i32_0 : i32, i32
  }
  func.func @transform_3(%arg0: i32) -> (i32, i32) {
    %c0_i32 = arith.constant 0 : i32
    %c0_i32_0 = arith.constant 0 : i32
    %c0_i32_1 = arith.constant 0 : i32
    return %c0_i32, %c0_i32_0 : i32, i32
  }
  func.func @transform_4(%arg0: i32) -> (i32, i32) {
    %c0_i32 = arith.constant 0 : i32
    %c0_i32_0 = arith.constant 0 : i32
    %c0_i32_1 = arith.constant 0 : i32
    return %c0_i32, %c0_i32_0 : i32, i32
  }
  func.func @transform_5(%arg0: i32) -> (i32, i32) {
    %c0_i32 = arith.constant 0 : i32
    %c0_i32_0 = arith.constant 0 : i32
    %c0_i32_1 = arith.constant 0 : i32
    return %c0_i32, %c0_i32_0 : i32, i32
  }
  func.func @transform_6(%arg0: i32) -> (i32, i32) {
    %c0_i32 = arith.constant 0 : i32
    %c0_i32_0 = arith.constant 0 : i32
    %c0_i32_1 = arith.constant 0 : i32
    return %c0_i32, %c0_i32_0 : i32, i32
  }
  func.func @transform_7(%arg0: i32) -> (i32, i32) {
    %c0_i32 = arith.constant 0 : i32
    %c0_i32_0 = arith.constant 0 : i32
    return %arg0, %c0_i32 : i32, i32
  }
}

</mosaic_0001>

<llo_original>
// kernel: tpu_custom_call.1
$region0: #{tpu_custom_call.1}
  #allocation0 [shape = 'u32[]', space=smem, size = 0x4, offset = 0x4, fixed_abs, tag = 'smem constant byte address 0x4 - core index']
  #allocation1 [shape = 'u32[144,128]{1,0:T(1,128)}', space=vmem, size = 0x12000, scoped, tag = 'internal scratch']
  %s0 = inlined_call_operand.vmem [shape: f32[128,16], index: 0, kind: input, shape index: {}]
  %s1 = inlined_call_operand.vmem [shape: f32[16,256], index: 1, kind: input, shape index: {}]
  %s2 = inlined_call_operand.vmem [shape: f32[1,256], index: 2, kind: input, shape index: {}]
  %s3 = inlined_call_operand.hbm [shape: f32[256,256], index: 3, kind: input, shape index: {}]
  %s4 = inlined_call_operand.vmem [shape: f32[1,256], index: 4, kind: input, shape index: {}]
  %s5 = inlined_call_operand.vmem [shape: f32[256,16], index: 5, kind: input, shape index: {}]
  %s6 = inlined_call_operand.vmem [shape: f32[1,16], index: 6, kind: input, shape index: {}]
  %s7 = inlined_call_operand.vmem [shape: f32[128,16], index: 7, kind: output, shape index: {}]
  %s8 = sld [smem:[#allocation0]]
  $region42: #{tpu_custom_call.1} parent=0
    _
  %s10 = ssub.s32 1, %s8
  %s11 = scalar_select 0, %s10, %s8
  $region1: #{tpu_custom_call.1} parent=0
    #allocation2 [shape = 'u8[262144]{0}', space=vmem, size = 0x40000, scoped, tag = 'input window, operand 3, single buffered']
    #allocation3 [shape = 's32[1]{0}', space=sflag, size = 0x4, scoped, tag = 'scoped memory for tpu_custom_call.1']
    %12 = vsyncpa [#allocation3], 0
    // Predicated region
    $region2: #{tpu_custom_call.1} parent=1 // pred_check
      _
    $region3: #{tpu_custom_call.1} parent=1 // pred_check_branch
      %14 = sbr.rel (0) target = $region5
    $region4: #{tpu_custom_call.1} parent=1 // pred_region
      _
    $region5: #{tpu_custom_call.1} parent=1 // pred_fallthru
      _
    // Predicated region
    $region6: #{tpu_custom_call.1} parent=1 // pred_check
      _
    $region7: #{tpu_custom_call.1} parent=1 // pred_check_branch
      %16 = sbr.rel (0) target = $region9
    $region8: #{tpu_custom_call.1} parent=1 // pred_region
      _
    $region9: #{tpu_custom_call.1} parent=1 // pred_fallthru
      _
    // Predicated region
    $region10: #{tpu_custom_call.1} parent=1 // pred_check
      _
    $region11: #{tpu_custom_call.1} parent=1 // pred_check_branch
      %18 = sbr.rel (0) target = $region13
    $region12: #{tpu_custom_call.1} parent=1 // pred_region
      _
    $region13: #{tpu_custom_call.1} parent=1 // pred_fallthru
      _
    // Predicated region
    $region14: #{tpu_custom_call.1} parent=1 // pred_check
      _
    $region15: #{tpu_custom_call.1} parent=1 // pred_check_branch
      %20 = sbr.rel (0) target = $region17
    $region16: #{tpu_custom_call.1} parent=1 // pred_region
      %s22 = ssub.s32 8192, 8192
      %23 = vsyncadd [#allocation3], %s22
      %s24 = sshll.u32 [#allocation2], 4
      %s25 = int_to_ptr.vmem [resolvable:$true] %s24
      %30 = dma.hbm_to_vmem [thread:$0]  %s3, 8192, %s25, [#allocation3], 256, 256, 16
    $region17: #{tpu_custom_call.1} parent=1 // pred_fallthru
      _
    // Predicated region
    $region18: #{tpu_custom_call.1} parent=1 // pred_check
      _
    $region19: #{tpu_custom_call.1} parent=1 // pred_check_branch
      %32 = sbr.rel (0) target = $region21
    $region20: #{tpu_custom_call.1} parent=1 // pred_region
      _
    $region21: #{tpu_custom_call.1} parent=1 // pred_fallthru
      _
    // Predicated region
    $region22: #{tpu_custom_call.1} parent=1 // pred_check
      _
    $region23: #{tpu_custom_call.1} parent=1 // pred_check_branch
      %34 = sbr.rel (0) target = $region25
    $region24: #{tpu_custom_call.1} parent=1 // pred_region
      _
    $region25: #{tpu_custom_call.1} parent=1 // pred_fallthru
      _
    // Predicated region
    $region26: #{tpu_custom_call.1} parent=1 // pred_check
      _
    $region27: #{tpu_custom_call.1} parent=1 // pred_check_branch
      %36 = sbr.rel (0) target = $region29
    $region28: #{tpu_custom_call.1} parent=1 // pred_region
      _
    $region29: #{tpu_custom_call.1} parent=1 // pred_fallthru
      _
    // Predicated region
    $region30: #{tpu_custom_call.1} parent=1 // pred_check
      _
    $region31: #{tpu_custom_call.1} parent=1 // pred_check_branch
      %38 = sbr.rel (0) target = $region33
    $region32: #{tpu_custom_call.1} parent=1 // pred_region
      %39 = dma.done [#allocation3], 8192
    $region33: #{tpu_custom_call.1} parent=1 // pred_fallthru
      _
    %v40 = vld [vmem:[%s0] sm:$0xff]
    %v41 = vld [vmem:[%s0 + $0x8] sm:$0xff]
    %v42 = vld [vmem:[%s0 + $0x10] sm:$0xff]
    %v43 = vld [vmem:[%s0 + $0x18] sm:$0xff]
    %v44 = vld [vmem:[%s0 + $0x20] sm:$0xff]
    %v45 = vld [vmem:[%s0 + $0x28] sm:$0xff]
    %v46 = vld [vmem:[%s0 + $0x30] sm:$0xff]
    %v47 = vld [vmem:[%s0 + $0x38] sm:$0xff]
    %v48 = vld [vmem:[%s0 + $0x40] sm:$0xff]
    %v49 = vld [vmem:[%s0 + $0x48] sm:$0xff]
    %v50 = vld [vmem:[%s0 + $0x50] sm:$0xff]
    %v51 = vld [vmem:[%s0 + $0x58] sm:$0xff]
    %v52 = vld [vmem:[%s0 + $0x60] sm:$0xff]
    %v53 = vld [vmem:[%s0 + $0x68] sm:$0xff]
    %v54 = vld [vmem:[%s0 + $0x70] sm:$0xff]
    %v55 = vld [vmem:[%s0 + $0x78] sm:$0xff]
    %v56 = vld [vmem:[%s1] sm:$0xff]
    %v57 = vld [vmem:[%s1 + $0x8] sm:$0xff]
    %v58 = vld [vmem:[%s1 + $0x10] sm:$0xff]
    %v59 = vld [vmem:[%s1 + $0x18] sm:$0xff]
    %v60 = vld [vmem:[%s2] sm:$0x3]
    %v62 = vlaneseq
    %v63 = vshrl.u32 %v62, 7
    %v64 = vsub.s32 0, %v63
    %v65 = vrot.slane %v60, %v64
    %v66 = vlaneseq
    %v67 = vshrl.u32 %v66, 7
    %v68 = vsub.s32 1, %v67
    %v69 = vrot.slane %v60, %v68
    %vm72 = vcmask 130048
    %v74 = vsel %vm72, %v40, 0
    %v77 = vsel %vm72, %v41, 0
    %v80 = vsel %vm72, %v42, 0
    %v83 = vsel %vm72, %v43, 0
    %v86 = vsel %vm72, %v44, 0
    %v89 = vsel %vm72, %v45, 0
    %v92 = vsel %vm72, %v46, 0
    %v95 = vsel %vm72, %v47, 0
    %v98 = vsel %vm72, %v48, 0
    %v101 = vsel %vm72, %v49, 0
    %v104 = vsel %vm72, %v50, 0
    %v107 = vsel %vm72, %v51, 0
    %v110 = vsel %vm72, %v52, 0
    %v113 = vsel %vm72, %v53, 0
    %v116 = vsel %vm72, %v54, 0
    %v119 = vsel %vm72, %v55, 0
    %121 = vmatprep.subr.mxu0 0.0
    %122 = vmatpush1.msra.mxu0 0.0
    %123 = vmatprep.subr.mxu0 0.0
    %124 = vmatpush1.msra.mxu0 0.0
    %125 = vmatprep.subr.mxu0 0.0
    %126 = vmatpush1.msra.mxu0 0.0
    %127 = vmatprep.subr.mxu0 0.0
    %128 = vmatpush1.msra.mxu0 0.0
    %129 = vmatprep.subr.mxu0 0.0
    %130 = vmatpush1.msra.mxu0 0.0
    %131 = vmatprep.subr.mxu0 0.0
    %132 = vmatpush1.msra.mxu0 0.0
    %133 = vmatprep.subr.mxu0 0.0
    %134 = vmatpush1.msra.mxu0 0.0
    %135 = vmatprep.subr.mxu0 0.0
    %136 = vmatpush1.msra.mxu0 0.0
    %137 = vmatprep.subr.mxu0 0.0
    %138 = vmatpush1.msra.mxu0 0.0
    %139 = vmatprep.subr.mxu0 0.0
    %140 = vmatpush1.msra.mxu0 0.0
    %141 = vmatprep.subr.mxu0 0.0
    %142 = vmatpush1.msra.mxu0 0.0
    %143 = vmatprep.subr.mxu0 0.0
    %144 = vmatpush1.msra.mxu0 0.0
    %145 = vmatprep.subr.mxu0 0.0
    %146 = vmatpush1.msra.mxu0 0.0
    %147 = vmatprep.subr.mxu0 0.0
    %148 = vmatpush1.msra.mxu0 0.0
    %149 = vmatprep.subr.mxu0 %v59
    %150 = vmatpush1.msra.mxu0 %v58
    %151 = vmatprep.subr.mxu0 %v57
    %152 = vmatpush1.msra.mxu0 %v56
    %153 = vmatprep.subr.mxu0 0.0
    %154 = vmatpush2.msra.mxu0 0.0
    %155 = vmatprep.subr.mxu0 0.0
    %156 = vmatpush2.msra.mxu0 0.0
    %157 = vmatprep.subr.mxu0 0.0
    %158 = vmatpush2.msra.mxu0 0.0
    %159 = vmatprep.subr.mxu0 0.0
    %160 = vmatpush2.msra.mxu0 0.0
    %161 = vmatprep.subr.mxu0 0.0
    %162 = vmatpush2.msra.mxu0 0.0
    %163 = vmatprep.subr.mxu0 0.0
    %164 = vmatpush2.msra.mxu0 0.0
    %165 = vmatprep.subr.mxu0 0.0
    %166 = vmatpush2.msra.mxu0 0.0
    %167 = vmatprep.subr.mxu0 0.0
    %168 = vmatpush2.msra.mxu0 0.0
    %169 = vmatprep.subr.mxu0 0.0
    %170 = vmatpush2.msra.mxu0 0.0
    %171 = vmatprep.subr.mxu0 0.0
    %172 = vmatpush2.msra.mxu0 0.0
    %173 = vmatprep.subr.mxu0 0.0
    %174 = vmatpush2.msra.mxu0 0.0
    %175 = vmatprep.subr.mxu0 0.0
    %176 = vmatpush2.msra.mxu0 0.0
    %177 = vmatprep.subr.mxu0 0.0
    %178 = vmatpush2.msra.mxu0 0.0
    %179 = vmatprep.subr.mxu0 0.0
    %180 = vmatpush2.msra.mxu0 0.0
    %181 = vmatprep.subr.mxu0 0.0
    %182 = vmatpush2.msra.mxu0 0.0
    %183 = vmatprep.subr.mxu0 0.0
    %184 = vmatpush2.msra.mxu0 0.0
    %185 = vmatprep.mubr.f32.mxu0 0.0
    %186 = vmatmul.mubr.f32.gmra.mxu0 %v74
    %v187 = vpop.f32.mrf.mxu0
    %v188 = vadd.f32 %v65, %v187
    %v189 = vpop.f32.mrf.mxu0
    %v190 = vadd.f32 %v69, %v189
    %191 = vmatprep.mubr.f32.mxu0 0.0
    %192 = vmatmul.mubr.f32.gmra.mxu0 %v77
    %v193 = vpop.f32.mrf.mxu0
    %v194 = vadd.f32 %v65, %v193
    %v195 = vpop.f32.mrf.mxu0
    %v196 = vadd.f32 %v69, %v195
    %197 = vmatprep.mubr.f32.mxu0 0.0
    %198 = vmatmul.mubr.f32.gmra.mxu0 %v80
    %v199 = vpop.f32.mrf.mxu0
    %v200 = vadd.f32 %v65, %v199
    %v201 = vpop.f32.mrf.mxu0
    %v202 = vadd.f32 %v69, %v201
    %203 = vmatprep.mubr.f32.mxu0 0.0
    %204 = vmatmul.mubr.f32.gmra.mxu0 %v83
    %v205 = vpop.f32.mrf.mxu0
    %v206 = vadd.f32 %v65, %v205
    %v207 = vpop.f32.mrf.mxu0
    %v208 = vadd.f32 %v69, %v207
    %209 = vmatprep.mubr.f32.mxu0 0.0
    %210 = vmatmul.mubr.f32.gmra.mxu0 %v86
    %v211 = vpop.f32.mrf.mxu0
    %v212 = vadd.f32 %v65, %v211
    %v213 = vpop.f32.mrf.mxu0
    %v214 = vadd.f32 %v69, %v213
    %215 = vmatprep.mubr.f32.mxu0 0.0
    %216 = vmatmul.mubr.f32.gmra.mxu0 %v89
    %v217 = vpop.f32.mrf.mxu0
    %v218 = vadd.f32 %v65, %v217
    %v219 = vpop.f32.mrf.mxu0
    %v220 = vadd.f32 %v69, %v219
    %221 = vmatprep.mubr.f32.mxu0 0.0
    %222 = vmatmul.mubr.f32.gmra.mxu0 %v92
    %v223 = vpop.f32.mrf.mxu0
    %v224 = vadd.f32 %v65, %v223
    %v225 = vpop.f32.mrf.mxu0
    %v226 = vadd.f32 %v69, %v225
    %227 = vmatprep.mubr.f32.mxu0 0.0
    %228 = vmatmul.mubr.f32.gmra.mxu0 %v95
    %v229 = vpop.f32.mrf.mxu0
    %v230 = vadd.f32 %v65, %v229
    %v231 = vpop.f32.mrf.mxu0
    %v232 = vadd.f32 %v69, %v231
    %233 = vmatprep.mubr.f32.mxu0 0.0
    %234 = vmatmul.mubr.f32.gmra.mxu0 %v98
    %v235 = vpop.f32.mrf.mxu0
    %v236 = vadd.f32 %v65, %v235
    %v237 = vpop.f32.mrf.mxu0
    %v238 = vadd.f32 %v69, %v237
    %239 = vmatprep.mubr.f32.mxu0 0.0
    %240 = vmatmul.mubr.f32.gmra.mxu0 %v101
    %v241 = vpop.f32.mrf.mxu0
    %v242 = vadd.f32 %v65, %v241
    %v243 = vpop.f32.mrf.mxu0
    %v244 = vadd.f32 %v69, %v243
    %245 = vmatprep.mubr.f32.mxu0 0.0
    %246 = vmatmul.mubr.f32.gmra.mxu0 %v104
    %v247 = vpop.f32.mrf.mxu0
    %v248 = vadd.f32 %v65, %v247
    %v249 = vpop.f32.mrf.mxu0
    %v250 = vadd.f32 %v69, %v249
    %251 = vmatprep.mubr.f32.mxu0 0.0
    %252 = vmatmul.mubr.f32.gmra.mxu0 %v107
    %v253 = vpop.f32.mrf.mxu0
    %v254 = vadd.f32 %v65, %v253
    %v255 = vpop.f32.mrf.mxu0
    %v256 = vadd.f32 %v69, %v255
    %257 = vmatprep.mubr.f32.mxu0 0.0
    %258 = vmatmul.mubr.f32.gmra.mxu0 %v110
    %v259 = vpop.f32.mrf.mxu0
    %v260 = vadd.f32 %v65, %v259
    %v261 = vpop.f32.mrf.mxu0
    %v262 = vadd.f32 %v69, %v261
    %263 = vmatprep.mubr.f32.mxu0 0.0
    %264 = vmatmul.mubr.f32.gmra.mxu0 %v113
    %v265 = vpop.f32.mrf.mxu0
    %v266 = vadd.f32 %v65, %v265
    %v267 = vpop.f32.mrf.mxu0
    %v268 = vadd.f32 %v69, %v267
    %269 = vmatprep.mubr.f32.mxu0 0.0
    %270 = vmatmul.mubr.f32.gmra.mxu0 %v116
    %v271 = vpop.f32.mrf.mxu0
    %v272 = vadd.f32 %v65, %v271
    %v273 = vpop.f32.mrf.mxu0
    %v274 = vadd.f32 %v69, %v273
    %275 = vmatprep.mubr.f32.mxu0 0.0
    %276 = vmatmul.mubr.f32.gmra.mxu0 %v119
    %v277 = vpop.f32.mrf.mxu0
    %v278 = vadd.f32 %v65, %v277
    %v279 = vpop.f32.mrf.mxu0
    %v280 = vadd.f32 %v69, %v279
    %281 = vdwg.mxu0
    %v282 = vmax.f32 %v188, 0.0
    %v283 = vmax.f32 %v190, 0.0
    %v284 = vmax.f32 %v194, 0.0
    %v285 = vmax.f32 %v196, 0.0
    %v286 = vmax.f32 %v200, 0.0
    %v287 = vmax.f32 %v202, 0.0
    %v288 = vmax.f32 %v206, 0.0
    %v289 = vmax.f32 %v208, 0.0
    %v290 = vmax.f32 %v212, 0.0
    %v291 = vmax.f32 %v214, 0.0
    %v292 = vmax.f32 %v218, 0.0
    %v293 = vmax.f32 %v220, 0.0
    %v294 = vmax.f32 %v224, 0.0
    %v295 = vmax.f32 %v226, 0.0
    %v296 = vmax.f32 %v230, 0.0
    %v297 = vmax.f32 %v232, 0.0
    %v298 = vmax.f32 %v236, 0.0
    %v299 = vmax.f32 %v238, 0.0
    %v300 = vmax.f32 %v242, 0.0
    %v301 = vmax.f32 %v244, 0.0
    %v302 = vmax.f32 %v248, 0.0
    %v303 = vmax.f32 %v250, 0.0
    %v304 = vmax.f32 %v254, 0.0
    %v305 = vmax.f32 %v256, 0.0
    %v306 = vmax.f32 %v260, 0.0
    %v307 = vmax.f32 %v262, 0.0
    %v308 = vmax.f32 %v266, 0.0
    %v309 = vmax.f32 %v268, 0.0
    %v310 = vmax.f32 %v272, 0.0
    %v311 = vmax.f32 %v274, 0.0
    %v312 = vmax.f32 %v278, 0.0
    %v313 = vmax.f32 %v280, 0.0
    %v314 = vld [vmem:[#allocation2] sm:$0xff]
    %v315 = vld [vmem:[#allocation2 + $0x8] sm:$0xff]
    %v316 = vld [vmem:[#allocation2 + $0x10] sm:$0xff]
    %v317 = vld [vmem:[#allocation2 + $0x18] sm:$0xff]
    %v318 = vld [vmem:[#allocation2 + $0x20] sm:$0xff]
    %v319 = vld [vmem:[#allocation2 + $0x28] sm:$0xff]
    %v320 = vld [vmem:[#allocation2 + $0x30] sm:$0xff]
    %v321 = vld [vmem:[#allocation2 + $0x38] sm:$0xff]
    %v322 = vld [vmem:[#allocation2 + $0x40] sm:$0xff]
    %v323 = vld [vmem:[#allocation2 + $0x48] sm:$0xff]
    %v324 = vld [vmem:[#allocation2 + $0x50] sm:$0xff]
    %v325 = vld [vmem:[#allocation2 + $0x58] sm:$0xff]
    %v326 = vld [vmem:[#allocation2 + $0x60] sm:$0xff]
    %v327 = vld [vmem:[#allocation2 + $0x68] sm:$0xff]
    %v328 = vld [vmem:[#allocation2 + $0x70] sm:$0xff]
    %v329 = vld [vmem:[#allocation2 + $0x78] sm:$0xff]
    %v330 = vld [vmem:[#allocation2 + $0x80] sm:$0xff]
    %v331 = vld [vmem:[#allocation2 + $0x88] sm:$0xff]
    %v332 = vld [vmem:[#allocation2 + $0x90] sm:$0xff]
    %v333 = vld [vmem:[#allocation2 + $0x98] sm:$0xff]
    %v334 = vld [vmem:[#allocation2 + $0xa0] sm:$0xff]
    %v335 = vld [vmem:[#allocation2 + $0xa8] sm:$0xff]
    %v336 = vld [vmem:[#allocation2 + $0xb0] sm:$0xff]
    %v337 = vld [vmem:[#allocation2 + $0xb8] sm:$0xff]
    %v338 = vld [vmem:[#allocation2 + $0xc0] sm:$0xff]
    %v339 = vld [vmem:[#allocation2 + $0xc8] sm:$0xff]
    %v340 = vld [vmem:[#allocation2 + $0xd0] sm:$0xff]
    %v341 = vld [vmem:[#allocation2 + $0xd8] sm:$0xff]
    %v342 = vld [vmem:[#allocation2 + $0xe0] sm:$0xff]
    %v343 = vld [vmem:[#allocation2 + $0xe8] sm:$0xff]
    %v344 = vld [vmem:[#allocation2 + $0xf0] sm:$0xff]
    %v345 = vld [vmem:[#allocation2 + $0xf8] sm:$0xff]
    %v346 = vld [vmem:[#allocation2 + $0x100] sm:$0xff]
    %v347 = vld [vmem:[#allocation2 + $0x108] sm:$0xff]
    %v348 = vld [vmem:[#allocation2 + $0x110] sm:$0xff]
    %v349 = vld [vmem:[#allocation2 + $0x118] sm:$0xff]
    %v350 = vld [vmem:[#allocation2 + $0x120] sm:$0xff]
    %v351 = vld [vmem:[#allocation2 + $0x128] sm:$0xff]
    %v352 = vld [vmem:[#allocation2 + $0x130] sm:$0xff]
    %v353 = vld [vmem:[#allocation2 + $0x138] sm:$0xff]
    %v354 = vld [vmem:[#allocation2 + $0x140] sm:$0xff]
    %v355 = vld [vmem:[#allocation2 + $0x148] sm:$0xff]
    %v356 = vld [vmem:[#allocation2 + $0x150] sm:$0xff]
    %v357 = vld [vmem:[#allocation2 + $0x158] sm:$0xff]
    %v358 = vld [vmem:[#allocation2 + $0x160] sm:$0xff]
    %v359 = vld [vmem:[#allocation2 + $0x168] sm:$0xff]
    %v360 = vld [vmem:[#allocation2 + $0x170] sm:$0xff]
    %v361 = vld [vmem:[#allocation2 + $0x178] sm:$0xff]
    %v362 = vld [vmem:[#allocation2 + $0x180] sm:$0xff]
    %v363 = vld [vmem:[#allocation2 + $0x188] sm:$0xff]
    %v364 = vld [vmem:[#allocation2 + $0x190] sm:$0xff]
    %v365 = vld [vmem:[#allocation2 + $0x198] sm:$0xff]
    %v366 = vld [vmem:[#allocation2 + $0x1a0] sm:$0xff]
    %v367 = vld [vmem:[#allocation2 + $0x1a8] sm:$0xff]
    %v368 = vld [vmem:[#allocation2 + $0x1b0] sm:$0xff]
    %v369 = vld [vmem:[#allocation2 + $0x1b8] sm:$0xff]
    %v370 = vld [vmem:[#allocation2 + $0x1c0] sm:$0xff]
    %v371 = vld [vmem:[#allocation2 + $0x1c8] sm:$0xff]
    %v372 = vld [vmem:[#allocation2 + $0x1d0] sm:$0xff]
    %v373 = vld [vmem:[#allocation2 + $0x1d8] sm:$0xff]
    %v374 = vld [vmem:[#allocation2 + $0x1e0] sm:$0xff]
    %v375 = vld [vmem:[#allocation2 + $0x1e8] sm:$0xff]
    %v376 = vld [vmem:[#allocation2 + $0x1f0] sm:$0xff]
    %v377 = vld [vmem:[#allocation2 + $0x1f8] sm:$0xff]
    %v378 = vld [vmem:[%s4] sm:$0x3]
    %v380 = vlaneseq
    %v381 = vshrl.u32 %v380, 7
    %v382 = vsub.s32 0, %v381
    %v383 = vrot.slane %v378, %v382
    %v384 = vlaneseq
    %v385 = vshrl.u32 %v384, 7
    %v386 = vsub.s32 1, %v385
    %v387 = vrot.slane %v378, %v386
    %390 = vmatprep.subr.mxu0 %v345
    %391 = vmatpush1.msra.mxu0 %v344
    %392 = vmatprep.subr.mxu0 %v343
    %393 = vmatpush1.msra.mxu0 %v342
    %394 = vmatprep.subr.mxu0 %v341
    %395 = vmatpush1.msra.mxu0 %v340
    %396 = vmatprep.subr.mxu0 %v339
    %397 = vmatpush1.msra.mxu0 %v338
    %398 = vmatprep.subr.mxu0 %v337
    %399 = vmatpush1.msra.mxu0 %v336
    %400 = vmatprep.subr.mxu0 %v335
    %401 = vmatpush1.msra.mxu0 %v334
    %402 = vmatprep.subr.mxu0 %v333
    %403 = vmatpush1.msra.mxu0 %v332
    %404 = vmatprep.subr.mxu0 %v331
    %405 = vmatpush1.msra.mxu0 %v330
    %406 = vmatprep.subr.mxu0 %v329
    %407 = vmatpush1.msra.mxu0 %v328
    %408 = vmatprep.subr.mxu0 %v327
    %409 = vmatpush1.msra.mxu0 %v326
    %410 = vmatprep.subr.mxu0 %v325
    %411 = vmatpush1.msra.mxu0 %v324
    %412 = vmatprep.subr.mxu0 %v323
    %413 = vmatpush1.msra.mxu0 %v322
    %414 = vmatprep.subr.mxu0 %v321
    %415 = vmatpush1.msra.mxu0 %v320
    %416 = vmatprep.subr.mxu0 %v319
    %417 = vmatpush1.msra.mxu0 %v318
    %418 = vmatprep.subr.mxu0 %v317
    %419 = vmatpush1.msra.mxu0 %v316
    %420 = vmatprep.subr.mxu0 %v315
    %421 = vmatpush1.msra.mxu0 %v314
    %422 = vmatprep.subr.mxu0 %v377
    %423 = vmatpush2.msra.mxu0 %v376
    %424 = vmatprep.subr.mxu0 %v375
    %425 = vmatpush2.msra.mxu0 %v374
    %426 = vmatprep.subr.mxu0 %v373
    %427 = vmatpush2.msra.mxu0 %v372
    %428 = vmatprep.subr.mxu0 %v371
    %429 = vmatpush2.msra.mxu0 %v370
    %430 = vmatprep.subr.mxu0 %v369
    %431 = vmatpush2.msra.mxu0 %v368
    %432 = vmatprep.subr.mxu0 %v367
    %433 = vmatpush2.msra.mxu0 %v366
    %434 = vmatprep.subr.mxu0 %v365
    %435 = vmatpush2.msra.mxu0 %v364
    %436 = vmatprep.subr.mxu0 %v363
    %437 = vmatpush2.msra.mxu0 %v362
    %438 = vmatprep.subr.mxu0 %v361
    %439 = vmatpush2.msra.mxu0 %v360
    %440 = vmatprep.subr.mxu0 %v359
    %441 = vmatpush2.msra.mxu0 %v358
    %442 = vmatprep.subr.mxu0 %v357
    %443 = vmatpush2.msra.mxu0 %v356
    %444 = vmatprep.subr.mxu0 %v355
    %445 = vmatpush2.msra.mxu0 %v354
    %446 = vmatprep.subr.mxu0 %v353
    %447 = vmatpush2.msra.mxu0 %v352
    %448 = vmatprep.subr.mxu0 %v351
    %449 = vmatpush2.msra.mxu0 %v350
    %450 = vmatprep.subr.mxu0 %v349
    %451 = vmatpush2.msra.mxu0 %v348
    %452 = vmatprep.subr.mxu0 %v347
    %453 = vmatpush2.msra.mxu0 %v346
    %454 = vmatprep.mubr.f32.mxu0 %v283
    %455 = vmatmul.mubr.f32.gmra.mxu0 %v282
    %v456 = vpop.f32.mrf.mxu0
    %v457 = vadd.f32 %v383, %v456
    %v458 = vpop.f32.mrf.mxu0
    %v459 = vadd.f32 %v387, %v458
    %460 = vmatprep.mubr.f32.mxu0 %v285
    %461 = vmatmul.mubr.f32.gmra.mxu0 %v284
    %v462 = vpop.f32.mrf.mxu0
    %v463 = vadd.f32 %v383, %v462
    %v464 = vpop.f32.mrf.mxu0
    %v465 = vadd.f32 %v387, %v464
    %466 = vmatprep.mubr.f32.mxu0 %v287
    %467 = vmatmul.mubr.f32.gmra.mxu0 %v286
    %v468 = vpop.f32.mrf.mxu0
    %v469 = vadd.f32 %v383, %v468
    %v470 = vpop.f32.mrf.mxu0
    %v471 = vadd.f32 %v387, %v470
    %472 = vmatprep.mubr.f32.mxu0 %v289
    %473 = vmatmul.mubr.f32.gmra.mxu0 %v288
    %v474 = vpop.f32.mrf.mxu0
    %v475 = vadd.f32 %v383, %v474
    %v476 = vpop.f32.mrf.mxu0
    %v477 = vadd.f32 %v387, %v476
    %478 = vmatprep.mubr.f32.mxu0 %v291
    %479 = vmatmul.mubr.f32.gmra.mxu0 %v290
    %v480 = vpop.f32.mrf.mxu0
    %v481 = vadd.f32 %v383, %v480
    %v482 = vpop.f32.mrf.mxu0
    %v483 = vadd.f32 %v387, %v482
    %484 = vmatprep.mubr.f32.mxu0 %v293
    %485 = vmatmul.mubr.f32.gmra.mxu0 %v292
    %v486 = vpop.f32.mrf.mxu0
    %v487 = vadd.f32 %v383, %v486
    %v488 = vpop.f32.mrf.mxu0
    %v489 = vadd.f32 %v387, %v488
    %490 = vmatprep.mubr.f32.mxu0 %v295
    %491 = vmatmul.mubr.f32.gmra.mxu0 %v294
    %v492 = vpop.f32.mrf.mxu0
    %v493 = vadd.f32 %v383, %v492
    %v494 = vpop.f32.mrf.mxu0
    %v495 = vadd.f32 %v387, %v494
    %496 = vmatprep.mubr.f32.mxu0 %v297
    %497 = vmatmul.mubr.f32.gmra.mxu0 %v296
    %v498 = vpop.f32.mrf.mxu0
    %v499 = vadd.f32 %v383, %v498
    %v500 = vpop.f32.mrf.mxu0
    %v501 = vadd.f32 %v387, %v500
    %502 = vmatprep.mubr.f32.mxu0 %v299
    %503 = vmatmul.mubr.f32.gmra.mxu0 %v298
    %v504 = vpop.f32.mrf.mxu0
    %v505 = vadd.f32 %v383, %v504
    %v506 = vpop.f32.mrf.mxu0
    %v507 = vadd.f32 %v387, %v506
    %508 = vmatprep.mubr.f32.mxu0 %v301
    %509 = vmatmul.mubr.f32.gmra.mxu0 %v300
    %v510 = vpop.f32.mrf.mxu0
    %v511 = vadd.f32 %v383, %v510
    %v512 = vpop.f32.mrf.mxu0
    %v513 = vadd.f32 %v387, %v512
    %514 = vmatprep.mubr.f32.mxu0 %v303
    %515 = vmatmul.mubr.f32.gmra.mxu0 %v302
    %v516 = vpop.f32.mrf.mxu0
    %v517 = vadd.f32 %v383, %v516
    %v518 = vpop.f32.mrf.mxu0
    %v519 = vadd.f32 %v387, %v518
    %520 = vmatprep.mubr.f32.mxu0 %v305
    %521 = vmatmul.mubr.f32.gmra.mxu0 %v304
    %v522 = vpop.f32.mrf.mxu0
    %v523 = vadd.f32 %v383, %v522
    %v524 = vpop.f32.mrf.mxu0
    %v525 = vadd.f32 %v387, %v524
    %526 = vmatprep.mubr.f32.mxu0 %v307
    %527 = vmatmul.mubr.f32.gmra.mxu0 %v306
    %v528 = vpop.f32.mrf.mxu0
    %v529 = vadd.f32 %v383, %v528
    %v530 = vpop.f32.mrf.mxu0
    %v531 = vadd.f32 %v387, %v530
    %532 = vmatprep.mubr.f32.mxu0 %v309
    %533 = vmatmul.mubr.f32.gmra.mxu0 %v308
    %v534 = vpop.f32.mrf.mxu0
    %v535 = vadd.f32 %v383, %v534
    %v536 = vpop.f32.mrf.mxu0
    %v537 = vadd.f32 %v387, %v536
    %538 = vmatprep.mubr.f32.mxu0 %v311
    %539 = vmatmul.mubr.f32.gmra.mxu0 %v310
    %v540 = vpop.f32.mrf.mxu0
    %v541 = vadd.f32 %v383, %v540
    %v542 = vpop.f32.mrf.mxu0
    %v543 = vadd.f32 %v387, %v542
    %544 = vmatprep.mubr.f32.mxu0 %v313
    %545 = vmatmul.mubr.f32.gmra.mxu0 %v312
    %v546 = vpop.f32.mrf.mxu0
    %v547 = vadd.f32 %v383, %v546
    %v548 = vpop.f32.mrf.mxu0
    %v549 = vadd.f32 %v387, %v548
    %550 = vdwg.mxu0
    %v551 = vmax.f32 %v457, 0.0
    %v552 = vmax.f32 %v459, 0.0
    %v553 = vmax.f32 %v463, 0.0
    %v554 = vmax.f32 %v465, 0.0
    %v555 = vmax.f32 %v469, 0.0
    %v556 = vmax.f32 %v471, 0.0
    %v557 = vmax.f32 %v475, 0.0
    %v558 = vmax.f32 %v477, 0.0
    %v559 = vmax.f32 %v481, 0.0
    %v560 = vmax.f32 %v483, 0.0
    %v561 = vmax.f32 %v487, 0.0
    %v562 = vmax.f32 %v489, 0.0
    %v563 = vmax.f32 %v493, 0.0
    %v564 = vmax.f32 %v495, 0.0
    %v565 = vmax.f32 %v499, 0.0
    %v566 = vmax.f32 %v501, 0.0
    %v567 = vmax.f32 %v505, 0.0
    %v568 = vmax.f32 %v507, 0.0
    %v569 = vmax.f32 %v511, 0.0
    %v570 = vmax.f32 %v513, 0.0
    %v571 = vmax.f32 %v517, 0.0
    %v572 = vmax.f32 %v519, 0.0
    %v573 = vmax.f32 %v523, 0.0
    %v574 = vmax.f32 %v525, 0.0
    %v575 = vmax.f32 %v529, 0.0
    %v576 = vmax.f32 %v531, 0.0
    %v577 = vmax.f32 %v535, 0.0
    %v578 = vmax.f32 %v537, 0.0
    %v579 = vmax.f32 %v541, 0.0
    %v580 = vmax.f32 %v543, 0.0
    %v581 = vmax.f32 %v547, 0.0
    %v582 = vmax.f32 %v549, 0.0
    %v583 = vld [vmem:[%s5] sm:$0xff]
    %v584 = vld [vmem:[%s5 + $0x8] sm:$0xff]
    %v585 = vld [vmem:[%s5 + $0x10] sm:$0xff]
    %v586 = vld [vmem:[%s5 + $0x18] sm:$0xff]
    %v587 = vld [vmem:[%s5 + $0x20] sm:$0xff]
    %v588 = vld [vmem:[%s5 + $0x28] sm:$0xff]
    %v589 = vld [vmem:[%s5 + $0x30] sm:$0xff]
    %v590 = vld [vmem:[%s5 + $0x38] sm:$0xff]
    %v591 = vld [vmem:[%s5 + $0x40] sm:$0xff]
    %v592 = vld [vmem:[%s5 + $0x48] sm:$0xff]
    %v593 = vld [vmem:[%s5 + $0x50] sm:$0xff]
    %v594 = vld [vmem:[%s5 + $0x58] sm:$0xff]
    %v595 = vld [vmem:[%s5 + $0x60] sm:$0xff]
    %v596 = vld [vmem:[%s5 + $0x68] sm:$0xff]
    %v597 = vld [vmem:[%s5 + $0x70] sm:$0xff]
    %v598 = vld [vmem:[%s5 + $0x78] sm:$0xff]
    %v599 = vld [vmem:[%s5 + $0x80] sm:$0xff]
    %v600 = vld [vmem:[%s5 + $0x88] sm:$0xff]
    %v601 = vld [vmem:[%s5 + $0x90] sm:$0xff]
    %v602 = vld [vmem:[%s5 + $0x98] sm:$0xff]
    %v603 = vld [vmem:[%s5 + $0xa0] sm:$0xff]
    %v604 = vld [vmem:[%s5 + $0xa8] sm:$0xff]
    %v605 = vld [vmem:[%s5 + $0xb0] sm:$0xff]
    %v606 = vld [vmem:[%s5 + $0xb8] sm:$0xff]
    %v607 = vld [vmem:[%s5 + $0xc0] sm:$0xff]
    %v608 = vld [vmem:[%s5 + $0xc8] sm:$0xff]
    %v609 = vld [vmem:[%s5 + $0xd0] sm:$0xff]
    %v610 = vld [vmem:[%s5 + $0xd8] sm:$0xff]
    %v611 = vld [vmem:[%s5 + $0xe0] sm:$0xff]
    %v612 = vld [vmem:[%s5 + $0xe8] sm:$0xff]
    %v613 = vld [vmem:[%s5 + $0xf0] sm:$0xff]
    %v614 = vld [vmem:[%s5 + $0xf8] sm:$0xff]
    %v615 = vld [vmem:[%s6] sm:$0x1]
    %v617 = vlaneseq
    %v618 = vshrl.u32 %v617, 7
    %v619 = vsub.s32 0, %v618
    %v620 = vrot.slane %v615, %v619
    %622 = vmatprep.subr.mxu0 0.0
    %623 = vmatpush1.msra.mxu0 %v598
    %624 = vmatprep.subr.mxu0 0.0
    %625 = vmatpush1.msra.mxu0 %v597
    %626 = vmatprep.subr.mxu0 0.0
    %627 = vmatpush1.msra.mxu0 %v596
    %628 = vmatprep.subr.mxu0 0.0
    %629 = vmatpush1.msra.mxu0 %v595
    %630 = vmatprep.subr.mxu0 0.0
    %631 = vmatpush1.msra.mxu0 %v594
    %632 = vmatprep.subr.mxu0 0.0
    %633 = vmatpush1.msra.mxu0 %v593
    %634 = vmatprep.subr.mxu0 0.0
    %635 = vmatpush1.msra.mxu0 %v592
    %636 = vmatprep.subr.mxu0 0.0
    %637 = vmatpush1.msra.mxu0 %v591
    %638 = vmatprep.subr.mxu0 0.0
    %639 = vmatpush1.msra.mxu0 %v590
    %640 = vmatprep.subr.mxu0 0.0
    %641 = vmatpush1.msra.mxu0 %v589
    %642 = vmatprep.subr.mxu0 0.0
    %643 = vmatpush1.msra.mxu0 %v588
    %644 = vmatprep.subr.mxu0 0.0
    %645 = vmatpush1.msra.mxu0 %v587
    %646 = vmatprep.subr.mxu0 0.0
    %647 = vmatpush1.msra.mxu0 %v586
    %648 = vmatprep.subr.mxu0 0.0
    %649 = vmatpush1.msra.mxu0 %v585
    %650 = vmatprep.subr.mxu0 0.0
    %651 = vmatpush1.msra.mxu0 %v584
    %652 = vmatprep.subr.mxu0 0.0
    %653 = vmatpush1.msra.mxu0 %v583
    %654 = vmatprep.subr.mxu0 0.0
    %655 = vmatpush2.msra.mxu0 %v614
    %656 = vmatprep.subr.mxu0 0.0
    %657 = vmatpush2.msra.mxu0 %v613
    %658 = vmatprep.subr.mxu0 0.0
    %659 = vmatpush2.msra.mxu0 %v612
    %660 = vmatprep.subr.mxu0 0.0
    %661 = vmatpush2.msra.mxu0 %v611
    %662 = vmatprep.subr.mxu0 0.0
    %663 = vmatpush2.msra.mxu0 %v610
    %664 = vmatprep.subr.mxu0 0.0
    %665 = vmatpush2.msra.mxu0 %v609
    %666 = vmatprep.subr.mxu0 0.0
    %667 = vmatpush2.msra.mxu0 %v608
    %668 = vmatprep.subr.mxu0 0.0
    %669 = vmatpush2.msra.mxu0 %v607
    %670 = vmatprep.subr.mxu0 0.0
    %671 = vmatpush2.msra.mxu0 %v606
    %672 = vmatprep.subr.mxu0 0.0
    %673 = vmatpush2.msra.mxu0 %v605
    %674 = vmatprep.subr.mxu0 0.0
    %675 = vmatpush2.msra.mxu0 %v604
    %676 = vmatprep.subr.mxu0 0.0
    %677 = vmatpush2.msra.mxu0 %v603
    %678 = vmatprep.subr.mxu0 0.0
    %679 = vmatpush2.msra.mxu0 %v602
    %680 = vmatprep.subr.mxu0 0.0
    %681 = vmatpush2.msra.mxu0 %v601
    %682 = vmatprep.subr.mxu0 0.0
    %683 = vmatpush2.msra.mxu0 %v600
    %684 = vmatprep.subr.mxu0 0.0
    %685 = vmatpush2.msra.mxu0 %v599
    %686 = vmatprep.mubr.f32.mxu0 %v552
    %687 = vmatmul.mubr.f32.gmra.mxu0 %v551
    %v688 = vpop.f32.mrf.mxu0
    %v689 = vadd.f32 %v620, %v688
    %v690 = vpop.f32.mrf.mxu0
    %691 = vmatprep.mubr.f32.mxu0 %v554
    %692 = vmatmul.mubr.f32.gmra.mxu0 %v553
    %v693 = vpop.f32.mrf.mxu0
    %v694 = vadd.f32 %v620, %v693
    %v695 = vpop.f32.mrf.mxu0
    %696 = vmatprep.mubr.f32.mxu0 %v556
    %697 = vmatmul.mubr.f32.gmra.mxu0 %v555
    %v698 = vpop.f32.mrf.mxu0
    %v699 = vadd.f32 %v620, %v698
    %v700 = vpop.f32.mrf.mxu0
    %701 = vmatprep.mubr.f32.mxu0 %v558
    %702 = vmatmul.mubr.f32.gmra.mxu0 %v557
    %v703 = vpop.f32.mrf.mxu0
    %v704 = vadd.f32 %v620, %v703
    %v705 = vpop.f32.mrf.mxu0
    %706 = vmatprep.mubr.f32.mxu0 %v560
    %707 = vmatmul.mubr.f32.gmra.mxu0 %v559
    %v708 = vpop.f32.mrf.mxu0
    %v709 = vadd.f32 %v620, %v708
    %v710 = vpop.f32.mrf.mxu0
    %711 = vmatprep.mubr.f32.mxu0 %v562
    %712 = vmatmul.mubr.f32.gmra.mxu0 %v561
    %v713 = vpop.f32.mrf.mxu0
    %v714 = vadd.f32 %v620, %v713
    %v715 = vpop.f32.mrf.mxu0
    %716 = vmatprep.mubr.f32.mxu0 %v564
    %717 = vmatmul.mubr.f32.gmra.mxu0 %v563
    %v718 = vpop.f32.mrf.mxu0
    %v719 = vadd.f32 %v620, %v718
    %v720 = vpop.f32.mrf.mxu0
    %721 = vmatprep.mubr.f32.mxu0 %v566
    %722 = vmatmul.mubr.f32.gmra.mxu0 %v565
    %v723 = vpop.f32.mrf.mxu0
    %v724 = vadd.f32 %v620, %v723
    %v725 = vpop.f32.mrf.mxu0
    %726 = vmatprep.mubr.f32.mxu0 %v568
    %727 = vmatmul.mubr.f32.gmra.mxu0 %v567
    %v728 = vpop.f32.mrf.mxu0
    %v729 = vadd.f32 %v620, %v728
    %v730 = vpop.f32.mrf.mxu0
    %731 = vmatprep.mubr.f32.mxu0 %v570
    %732 = vmatmul.mubr.f32.gmra.mxu0 %v569
    %v733 = vpop.f32.mrf.mxu0
    %v734 = vadd.f32 %v620, %v733
    %v735 = vpop.f32.mrf.mxu0
    %736 = vmatprep.mubr.f32.mxu0 %v572
    %737 = vmatmul.mubr.f32.gmra.mxu0 %v571
    %v738 = vpop.f32.mrf.mxu0
    %v739 = vadd.f32 %v620, %v738
    %v740 = vpop.f32.mrf.mxu0
    %741 = vmatprep.mubr.f32.mxu0 %v574
    %742 = vmatmul.mubr.f32.gmra.mxu0 %v573
    %v743 = vpop.f32.mrf.mxu0
    %v744 = vadd.f32 %v620, %v743
    %v745 = vpop.f32.mrf.mxu0
    %746 = vmatprep.mubr.f32.mxu0 %v576
    %747 = vmatmul.mubr.f32.gmra.mxu0 %v575
    %v748 = vpop.f32.mrf.mxu0
    %v749 = vadd.f32 %v620, %v748
    %v750 = vpop.f32.mrf.mxu0
    %751 = vmatprep.mubr.f32.mxu0 %v578
    %752 = vmatmul.mubr.f32.gmra.mxu0 %v577
    %v753 = vpop.f32.mrf.mxu0
    %v754 = vadd.f32 %v620, %v753
    %v755 = vpop.f32.mrf.mxu0
    %756 = vmatprep.mubr.f32.mxu0 %v580
    %757 = vmatmul.mubr.f32.gmra.mxu0 %v579
    %v758 = vpop.f32.mrf.mxu0
    %v759 = vadd.f32 %v620, %v758
    %v760 = vpop.f32.mrf.mxu0
    %761 = vmatprep.mubr.f32.mxu0 %v582
    %762 = vmatmul.mubr.f32.gmra.mxu0 %v581
    %v763 = vpop.f32.mrf.mxu0
    %v764 = vadd.f32 %v620, %v763
    %v765 = vpop.f32.mrf.mxu0
    %766 = vdwg.mxu0
    %v767 = vlaneseq
    %v768 = vand.u32 %v767, 127
    %v769 = vmax.f32 %v689, -20.0
    %v770 = vmax.f32 %v694, -20.0
    %v771 = vmax.f32 %v699, -20.0
    %v772 = vmax.f32 %v704, -20.0
    %v773 = vmax.f32 %v709, -20.0
    %v774 = vmax.f32 %v714, -20.0
    %v775 = vmax.f32 %v719, -20.0
    %v776 = vmax.f32 %v724, -20.0
    %v777 = vmax.f32 %v729, -20.0
    %v778 = vmax.f32 %v734, -20.0
    %v779 = vmax.f32 %v739, -20.0
    %v780 = vmax.f32 %v744, -20.0
    %v781 = vmax.f32 %v749, -20.0
    %v782 = vmax.f32 %v754, -20.0
    %v783 = vmax.f32 %v759, -20.0
    %v784 = vmax.f32 %v764, -20.0
    %v785 = vmin.f32 %v769, 2.0
    %v786 = vmin.f32 %v770, 2.0
    %v787 = vmin.f32 %v771, 2.0
    %v788 = vmin.f32 %v772, 2.0
    %v789 = vmin.f32 %v773, 2.0
    %v790 = vmin.f32 %v774, 2.0
    %v791 = vmin.f32 %v775, 2.0
    %v792 = vmin.f32 %v776, 2.0
    %v793 = vmin.f32 %v777, 2.0
    %v794 = vmin.f32 %v778, 2.0
    %v795 = vmin.f32 %v779, 2.0
    %v796 = vmin.f32 %v780, 2.0
    %v797 = vmin.f32 %v781, 2.0
    %v798 = vmin.f32 %v782, 2.0
    %v799 = vmin.f32 %v783, 2.0
    %v800 = vmin.f32 %v784, 2.0
    %vm801 = vcmp.ge.s32.totalorder %v768, 8
    %v802 = vsel %vm801, %v785, %v689
    %v803 = vsel %vm801, %v786, %v694
    %v804 = vsel %vm801, %v787, %v699
    %v805 = vsel %vm801, %v788, %v704
    %v806 = vsel %vm801, %v789, %v709
    %v807 = vsel %vm801, %v790, %v714
    %v808 = vsel %vm801, %v791, %v719
    %v809 = vsel %vm801, %v792, %v724
    %v810 = vsel %vm801, %v793, %v729
    %v811 = vsel %vm801, %v794, %v734
    %v812 = vsel %vm801, %v795, %v739
    %v813 = vsel %vm801, %v796, %v744
    %v814 = vsel %vm801, %v797, %v749
    %v815 = vsel %vm801, %v798, %v754
    %v816 = vsel %vm801, %v799, %v759
    %v817 = vsel %vm801, %v800, %v764
    %818 = vst.msk [vmem:[%s7] sm:$0xff] %vm72, %v802
    %819 = vst.msk [vmem:[%s7 + $0x8] sm:$0xff] %vm72, %v803
    %820 = vst.msk [vmem:[%s7 + $0x10] sm:$0xff] %vm72, %v804
    %821 = vst.msk [vmem:[%s7 + $0x18] sm:$0xff] %vm72, %v805
    %822 = vst.msk [vmem:[%s7 + $0x20] sm:$0xff] %vm72, %v806
    %823 = vst.msk [vmem:[%s7 + $0x28] sm:$0xff] %vm72, %v807
    %824 = vst.msk [vmem:[%s7 + $0x30] sm:$0xff] %vm72, %v808
    %825 = vst.msk [vmem:[%s7 + $0x38] sm:$0xff] %vm72, %v809
    %826 = vst.msk [vmem:[%s7 + $0x40] sm:$0xff] %vm72, %v810
    %827 = vst.msk [vmem:[%s7 + $0x48] sm:$0xff] %vm72, %v811
    %828 = vst.msk [vmem:[%s7 + $0x50] sm:$0xff] %vm72, %v812
    %829 = vst.msk [vmem:[%s7 + $0x58] sm:$0xff] %vm72, %v813
    %830 = vst.msk [vmem:[%s7 + $0x60] sm:$0xff] %vm72, %v814
    %831 = vst.msk [vmem:[%s7 + $0x68] sm:$0xff] %vm72, %v815
    %832 = vst.msk [vmem:[%s7 + $0x70] sm:$0xff] %vm72, %v816
    %833 = vst.msk [vmem:[%s7 + $0x78] sm:$0xff] %vm72, %v817
    // Predicated region
    $region34: #{tpu_custom_call.1} parent=1 // pred_check
      _
    $region35: #{tpu_custom_call.1} parent=1 // pred_check_branch
      %835 = sbr.rel (0) target = $region37
    $region36: #{tpu_custom_call.1} parent=1 // pred_region
      _
    $region37: #{tpu_custom_call.1} parent=1 // pred_fallthru
      _
    // Predicated region
    $region38: #{tpu_custom_call.1} parent=1 // pred_check
      _
    $region39: #{tpu_custom_call.1} parent=1 // pred_check_branch
      %837 = sbr.rel (0) target = $region41
    $region40: #{tpu_custom_call.1} parent=1 // pred_region
      _
    $region41: #{tpu_custom_call.1} parent=1 // pred_fallthru
      _
    %838 = vsyncpa [#allocation3], 1

</llo_original>
